<compile_context>
chip_gen: v6e
topology: v6e:2x2x1
jax: 0.10.0
libtpu: 0.0.40
codegen_flags: <defaults>
</compile_context>

<pallas_src>
import jax
import jax.numpy as jnp
from jax.experimental import pallas as pl
from jax.experimental.pallas import tpu as pltpu


PACK = 8                 # batch rows packed per 128-lane row (8*16 = 128 input lanes)
TILE_P_CAP = 2048        # packed rows per grid step  (= 16384 batch rows)
MIN_SPLIT_P = 1024       # force >=2 grid steps above this many packed rows (v7x 2 TCs)


def _round_up(n: int, m: int) -> int:
    return -(-n // m) * m


def _make_mlp_kernel(num_layers: int):
    """Fused MLP kernel: all layers computed in VMEM for one packed batch tile."""

    def kernel(x_ref, *refs):
        # refs layout: [W1t, b1, W2t, b2, ..., WLt, bL, out]
        out_ref = refs[-1]
        param_refs = refs[:-1]
        h = x_ref[...]                              # (tile_p, PACK*in_size)
        for i in range(num_layers):
            wt = param_refs[2 * i][...]             # block-diag (PACK*in_i, PACK*out_i)
            b = param_refs[2 * i + 1][...]          # (1, PACK*out_i) f32
            if h.dtype != wt.dtype:
                # down-cast only right before the MXU dot (bias/ReLU stay f32 on VPU)
                h = h.astype(wt.dtype)
            h = jnp.dot(h, wt, preferred_element_type=jnp.float32) + b
            if i < num_layers - 1:                  # hidden layers: ReLU
                h = jnp.maximum(h, 0.0)
            # final layer: no activation (final_activation=None)
        # Output row is PACK*out_size wide (lane-dense / near lane-dense): unmasked
        # (or nearly unmasked) stores, no 16x lane padding of the output block.
        # TODO(synk): emit bf16 output here if the consumer tolerates it (halves
        # output HBM traffic); kept f32 to match the PyTorch module's dtype.
        out_ref[...] = h.astype(out_ref.dtype)

    return kernel


def prepare_params(weights, biases, compute_dtype=jnp.bfloat16, pack=PACK):
    """One-time parameter prep, hoisted out of the forward path.

    PyTorch nn.Linear stores (out, in).  We transpose to (in, out), then expand to the
    block-diagonal kron(I_pack, W^T) so the kernel can run on batch-packed, lane-dense
    activations.  Biases are tiled to (1, pack*out) f32 for lane broadcast.
    """
    params = []
    eye = jnp.eye(pack, dtype=jnp.float32)
    for w, b in zip(weights, biases):
        wt = jnp.asarray(w, jnp.float32).T                       # (in, out)
        w_big = jnp.kron(eye, wt).astype(compute_dtype)          # (pack*in, pack*out)
        b_big = jnp.tile(jnp.asarray(b, jnp.float32), pack)[None, :]
        params.append(w_big)
        params.append(b_big)
    return params


@jax.jit
def fully_connected_forecaster(x, params):
    """Forward pass: one gridded pallas_call on batch-packed activations.

    Args:
      x:      (batch, input_size) f32
      params: flat list [W1t_big, b1_big, ..., WLt_big, bL_big] from prepare_params()
    Returns:
      (batch, output_size) f32
    """
    num_layers = len(params) // 2
    batch, in_size = x.shape
    pack = params[0].shape[0] // in_size
    pack_in = params[0].shape[0]
    pack_out = params[-1].shape[-1]
    out_size = pack_out // pack

    # Pad batch to a multiple of `pack` only when necessary (no-op for typical batches).
    pb = _round_up(batch, pack)
    if pb != batch:
        x = jnp.pad(x, ((0, pb - batch), (0, 0)))
    P = pb // pack
    # Contiguous row-major reshape -> XLA bitcast, no HBM pass.
    xp = x.reshape(P, pack_in)

    # Tile sizing: big tiles to amortize per-step overhead; >=2 steps at large batch so
    # the "parallel" grid axis can use both TensorCores on v7x.
    min_steps = 2 if P >= MIN_SPLIT_P else 1
    tile_p = min(TILE_P_CAP, _round_up(-(-P // min_steps), 8))
    if tile_p >= P:
        tile_p = P                      # single full block (also handles P % 8 != 0)
    grid = (pl.cdiv(P, tile_p),)        # partial trailing block handled by Pallas

    kernel = _make_mlp_kernel(num_layers)

    x_spec = pl.BlockSpec((tile_p, pack_in), lambda i: (i, 0))
    # Weights/biases: whole-array blocks, constant index_map -> VMEM-resident across
    # every grid step (no re-DMA).
    param_specs = [pl.BlockSpec(p.shape, lambda i: (0, 0)) for p in params]
    out_spec = pl.BlockSpec((tile_p, pack_out), lambda i: (i, 0))

    # Advisory cost: this kernel is HBM-bandwidth / grid-overhead bound, not MXU bound.
    logical_flops = 2 * pb * sum(
        (params[2 * i].shape[0] // pack) * (params[2 * i].shape[1] // pack)
        for i in range(num_layers))
    bytes_acc = (xp.size * xp.dtype.itemsize
                 + P * pack_out * 4
                 + sum(p.size * p.dtype.itemsize for p in params))
    cost = pl.CostEstimate(flops=logical_flops, transcendentals=0,
                           bytes_accessed=bytes_acc)

    y = pl.pallas_call(
        kernel,
        out_shape=jax.ShapeDtypeStruct((P, pack_out), jnp.float32),
        grid=grid,
        in_specs=[x_spec] + param_specs,
        out_specs=out_spec,
        compiler_params=pltpu.CompilerParams(
            dimension_semantics=("parallel",),        # shard batch grid on v7x 2 TCs
            vmem_limit_bytes=48 * 1024 * 1024,        # room for big double-buffered tiles
        ),
        cost_estimate=cost,
    )(xp, *params)

    y = y.reshape(pb, out_size)          # contiguous reshape -> bitcast
    if pb != batch:
        y = y[:batch]                    # only when batch % pack != 0
    return y


def _reference(x, weights, biases):
    """Pure-JAX reference of the PyTorch forward (f32)."""
    h = x
    for i, (w, b) in enumerate(zip(weights, biases)):
        h = h @ w.T + b
        if i < len(weights) - 1:
            h = jnp.maximum(h, 0.0)
    return h


if __name__ == "__main__":
    # Module config: FullyConnectedForecaster(input_size=16, output_size=8,
    #                                         hidden_layer_sizes=[32, 32])
    input_size = 16
    output_size = 8
    hidden_layer_sizes = [32, 32]
    batch = 8

    layer_in = [input_size] + hidden_layer_sizes
    layer_out = hidden_layer_sizes + [output_size]

    key = jax.random.PRNGKey(0)
    keys = jax.random.split(key, 2 * len(layer_in) + 2)

    weights, biases = [], []
    for li, (n_in, n_out) in enumerate(zip(layer_in, layer_out)):
        # Deterministic init ~ PyTorch Linear's U(-1/sqrt(fan_in), 1/sqrt(fan_in))
        bound = 1.0 / jnp.sqrt(float(n_in))
        w = jax.random.uniform(keys[2 * li], (n_out, n_in), jnp.float32,
                               minval=-bound, maxval=bound)
        b = jax.random.uniform(keys[2 * li + 1], (n_out,), jnp.float32,
                               minval=-bound, maxval=bound)
        weights.append(w)
        biases.append(b)

    x = jax.random.normal(keys[-2], (batch, input_size), jnp.float32)
    y_ref = _reference(x, weights, biases)

    # 1) f32 compute path: must match the reference closely.
    params_f32 = prepare_params(weights, biases, compute_dtype=jnp.float32)
    y32 = jax.block_until_ready(fully_connected_forecaster(x, params_f32))
    assert y32.shape == (batch, output_size)
    assert jnp.allclose(y32, y_ref, atol=1e-4, rtol=1e-4), "f32 mismatch vs reference"

    # 2) bf16-MXU-input path (default perf config): f32 accumulation, so only
    #    bf16 input-rounding error vs the f32 reference.
    params_bf16 = prepare_params(weights, biases, compute_dtype=jnp.bfloat16)
    y16 = jax.block_until_ready(fully_connected_forecaster(x, params_bf16))
    assert y16.shape == (batch, output_size)
    assert jnp.allclose(y16, y_ref, atol=6e-2, rtol=6e-2), "bf16 mismatch vs reference"

    # 3) batch not a multiple of the packing factor (exercises the pad/slice fallback).
    batch2 = 45
    x2 = jax.random.normal(keys[-1], (batch2, input_size), jnp.float32)
    y2_ref = _reference(x2, weights, biases)
    y2 = jax.block_until_ready(fully_connected_forecaster(x2, params_bf16))
    assert y2.shape == (batch2, output_size)
    assert jnp.allclose(y2, y2_ref, atol=6e-2, rtol=6e-2), "bf16 odd-batch mismatch"

    print("KERNEL_OK")
</pallas_src>

<mosaic_0001>
module attributes {stable_mosaic.version = 11 : i64} {
  func.func @kernel(%arg0: i32, %arg1: memref<1x128xf32, #tpu.memory_space<vmem>>, %arg2: memref<128x256xf32, #tpu.memory_space<vmem>>, %arg3: memref<1x256xf32, #tpu.memory_space<vmem>>, %arg4: memref<256x256xf32, #tpu.memory_space<vmem>>, %arg5: memref<1x256xf32, #tpu.memory_space<vmem>>, %arg6: memref<256x64xf32, #tpu.memory_space<vmem>>, %arg7: memref<1x64xf32, #tpu.memory_space<vmem>>, %arg8: memref<1x64xf32, #tpu.memory_space<vmem>>) attributes {dimension_semantics = [#tpu.dimension_semantics<parallel>], iteration_bounds = array<i64: 1>, scalar_prefetch = 0 : i64, scratch_operands = 0 : i64, tpu.core_type = #tpu.core_type<tc>, window_params = [{transform_indices = @transform_0, window_bounds = array<i64: 1, 128>}, {pipeline_mode = #tpu.pipeline_mode<synchronous>, transform_indices = @transform_1, window_bounds = array<i64: 128, 256>}, {pipeline_mode = #tpu.pipeline_mode<synchronous>, transform_indices = @transform_2, window_bounds = array<i64: 1, 256>}, {pipeline_mode = #tpu.pipeline_mode<synchronous>, transform_indices = @transform_3, window_bounds = array<i64: 256, 256>}, {pipeline_mode = #tpu.pipeline_mode<synchronous>, transform_indices = @transform_4, window_bounds = array<i64: 1, 256>}, {pipeline_mode = #tpu.pipeline_mode<synchronous>, transform_indices = @transform_5, window_bounds = array<i64: 256, 64>}, {pipeline_mode = #tpu.pipeline_mode<synchronous>, transform_indices = @transform_6, window_bounds = array<i64: 1, 64>}, {transform_indices = @transform_7, window_bounds = array<i64: 1, 64>}]} {
    %c0 = arith.constant 0 : index
    %c0_0 = arith.constant 0 : index
    %0 = vector.load %arg1[%c0, %c0_0] : memref<1x128xf32, #tpu.memory_space<vmem>>, vector<1x128xf32>
    %c0_1 = arith.constant 0 : index
    %c0_2 = arith.constant 0 : index
    %1 = vector.load %arg2[%c0_1, %c0_2] : memref<128x256xf32, #tpu.memory_space<vmem>>, vector<128x256xf32>
    %c0_3 = arith.constant 0 : index
    %c0_4 = arith.constant 0 : index
    %2 = vector.load %arg3[%c0_3, %c0_4] : memref<1x256xf32, #tpu.memory_space<vmem>>, vector<1x256xf32>
    %cst = arith.constant dense<0.000000e+00> : vector<1x256xf32>
    %3 = tpu.matmul %0, %1, %cst {dimension_numbers = #tpu.dot_dimension_numbers<[1], [0], [0], [1], [0, 0, 1, 1], [], []>} : vector<1x128xf32>, vector<128x256xf32>, vector<1x256xf32> -> vector<1x256xf32>
    %4 = arith.addf %3, %2 : vector<1x256xf32>
    %cst_5 = arith.constant 0.000000e+00 : f32
    %5 = vector.broadcast %cst_5 : f32 to vector<1x256xf32>
    %6 = arith.maximumf %4, %5 : vector<1x256xf32>
    %c0_6 = arith.constant 0 : index
    %c0_7 = arith.constant 0 : index
    %7 = vector.load %arg4[%c0_6, %c0_7] : memref<256x256xf32, #tpu.memory_space<vmem>>, vector<256x256xf32>
    %c0_8 = arith.constant 0 : index
    %c0_9 = arith.constant 0 : index
    %8 = vector.load %arg5[%c0_8, %c0_9] : memref<1x256xf32, #tpu.memory_space<vmem>>, vector<1x256xf32>
    %cst_10 = arith.constant dense<0.000000e+00> : vector<1x256xf32>
    %9 = tpu.matmul %6, %7, %cst_10 {dimension_numbers = #tpu.dot_dimension_numbers<[1], [0], [0], [1], [0, 0, 1, 1], [], []>} : vector<1x256xf32>, vector<256x256xf32>, vector<1x256xf32> -> vector<1x256xf32>
    %10 = arith.addf %9, %8 : vector<1x256xf32>
    %cst_11 = arith.constant 0.000000e+00 : f32
    %11 = vector.broadcast %cst_11 : f32 to vector<1x256xf32>
    %12 = arith.maximumf %10, %11 : vector<1x256xf32>
    %c0_12 = arith.constant 0 : index
    %c0_13 = arith.constant 0 : index
    %13 = vector.load %arg6[%c0_12, %c0_13] : memref<256x64xf32, #tpu.memory_space<vmem>>, vector<256x64xf32>
    %c0_14 = arith.constant 0 : index
    %c0_15 = arith.constant 0 : index
    %14 = vector.load %arg7[%c0_14, %c0_15] : memref<1x64xf32, #tpu.memory_space<vmem>>, vector<1x64xf32>
    %cst_16 = arith.constant dense<0.000000e+00> : vector<1x64xf32>
    %15 = tpu.matmul %12, %13, %cst_16 {dimension_numbers = #tpu.dot_dimension_numbers<[1], [0], [0], [1], [0, 0, 1, 1], [], []>} : vector<1x256xf32>, vector<256x64xf32>, vector<1x64xf32> -> vector<1x64xf32>
    %16 = arith.addf %15, %14 : vector<1x64xf32>
    %c0_17 = arith.constant 0 : index
    %c0_18 = arith.constant 0 : index
    %17 = vector.load %arg8[%c0_17, %c0_18] : memref<1x64xf32, #tpu.memory_space<vmem>>, vector<1x64xf32>
    tpu.vector_store %arg8[%c0_17, %c0_18], %16 {strides = array<i32>} : memref<1x64xf32, #tpu.memory_space<vmem>>, vector<1x64xf32>,
    return
  }
  func.func @transform_0(%arg0: i32) -> (i32, i32) {
    %c0_i32 = arith.constant 0 : i32
    %c0_i32_0 = arith.constant 0 : i32
    return %arg0, %c0_i32 : i32, i32
  }
  func.func @transform_1(%arg0: i32) -> (i32, i32) {
    %c0_i32 = arith.constant 0 : i32
    %c0_i32_0 = arith.constant 0 : i32
    %c0_i32_1 = arith.constant 0 : i32
    return %c0_i32, %c0_i32_0 : i32, i32
  }
  func.func @transform_2(%arg0: i32) -> (i32, i32) {
    %c0_i32 = arith.constant 0 : i32
    %c0_i32_0 = arith.constant 0 : i32
    %c0_i32_1 = arith.constant 0 : i32
    return %c0_i32, %c0_i32_0 : i32, i32
  }
  func.func @transform_3(%arg0: i32) -> (i32, i32) {
    %c0_i32 = arith.constant 0 : i32
    %c0_i32_0 = arith.constant 0 : i32
    %c0_i32_1 = arith.constant 0 : i32
    return %c0_i32, %c0_i32_0 : i32, i32
  }
  func.func @transform_4(%arg0: i32) -> (i32, i32) {
    %c0_i32 = arith.constant 0 : i32
    %c0_i32_0 = arith.constant 0 : i32
    %c0_i32_1 = arith.constant 0 : i32
    return %c0_i32, %c0_i32_0 : i32, i32
  }
  func.func @transform_5(%arg0: i32) -> (i32, i32) {
    %c0_i32 = arith.constant 0 : i32
    %c0_i32_0 = arith.constant 0 : i32
    %c0_i32_1 = arith.constant 0 : i32
    return %c0_i32, %c0_i32_0 : i32, i32
  }
  func.func @transform_6(%arg0: i32) -> (i32, i32) {
    %c0_i32 = arith.constant 0 : i32
    %c0_i32_0 = arith.constant 0 : i32
    %c0_i32_1 = arith.constant 0 : i32
    return %c0_i32, %c0_i32_0 : i32, i32
  }
  func.func @transform_7(%arg0: i32) -> (i32, i32) {
    %c0_i32 = arith.constant 0 : i32
    %c0_i32_0 = arith.constant 0 : i32
    return %arg0, %c0_i32 : i32, i32
  }
}

</mosaic_0001>

<llo_original>
// kernel: fully_connected_forecaster.1
$region0: #{fully_connected_forecaster.1}
  #allocation0 [shape = 'u32[]', space=smem, size = 0x4, offset = 0x4, fixed_abs, tag = 'smem constant byte address 0x4 - core index']
  #allocation1 [shape = 'u32[144,128]{1,0:T(1,128)}', space=vmem, size = 0x12000, scoped, tag = 'internal scratch']
  %s0 = inlined_call_operand.vmem [shape: f32[1,128], index: 0, kind: input, shape index: {}]
  %s1 = inlined_call_operand.vmem [shape: f32[128,256], index: 1, kind: input, shape index: {}]
  %s2 = inlined_call_operand.vmem [shape: f32[1,256], index: 2, kind: input, shape index: {}]
  %s3 = inlined_call_operand.hbm [shape: f32[256,256], index: 3, kind: input, shape index: {}]
  %s4 = inlined_call_operand.vmem [shape: f32[1,256], index: 4, kind: input, shape index: {}]
  %s5 = inlined_call_operand.vmem [shape: f32[256,64], index: 5, kind: input, shape index: {}]
  %s6 = inlined_call_operand.vmem [shape: f32[1,64], index: 6, kind: input, shape index: {}]
  %s7 = inlined_call_operand.vmem [shape: f32[1,64], index: 7, kind: output, shape index: {}]
  %s8 = sld [smem:[#allocation0]]
  $region42: #{fully_connected_forecaster.1} parent=0
    _
  %s10 = ssub.s32 1, %s8
  %s11 = scalar_select 0, %s10, %s8
  $region1: #{fully_connected_forecaster.1} parent=0
    #allocation2 [shape = 'u8[262144]{0}', space=vmem, size = 0x40000, scoped, tag = 'input window, operand 3, single buffered']
    #allocation3 [shape = 's32[1]{0}', space=sflag, size = 0x4, scoped, tag = 'scoped memory for fully_connected_forecaster.1']
    %12 = vsyncpa [#allocation3], 0
    // Predicated region
    $region2: #{fully_connected_forecaster.1} parent=1 // pred_check
      _
    $region3: #{fully_connected_forecaster.1} parent=1 // pred_check_branch
      %14 = sbr.rel (0) target = $region5
    $region4: #{fully_connected_forecaster.1} parent=1 // pred_region
      _
    $region5: #{fully_connected_forecaster.1} parent=1 // pred_fallthru
      _
    // Predicated region
    $region6: #{fully_connected_forecaster.1} parent=1 // pred_check
      _
    $region7: #{fully_connected_forecaster.1} parent=1 // pred_check_branch
      %16 = sbr.rel (0) target = $region9
    $region8: #{fully_connected_forecaster.1} parent=1 // pred_region
      _
    $region9: #{fully_connected_forecaster.1} parent=1 // pred_fallthru
      _
    // Predicated region
    $region10: #{fully_connected_forecaster.1} parent=1 // pred_check
      _
    $region11: #{fully_connected_forecaster.1} parent=1 // pred_check_branch
      %18 = sbr.rel (0) target = $region13
    $region12: #{fully_connected_forecaster.1} parent=1 // pred_region
      _
    $region13: #{fully_connected_forecaster.1} parent=1 // pred_fallthru
      _
    // Predicated region
    $region14: #{fully_connected_forecaster.1} parent=1 // pred_check
      _
    $region15: #{fully_connected_forecaster.1} parent=1 // pred_check_branch
      %20 = sbr.rel (0) target = $region17
    $region16: #{fully_connected_forecaster.1} parent=1 // pred_region
      %s22 = ssub.s32 8192, 8192
      %23 = vsyncadd [#allocation3], %s22
      %s24 = sshll.u32 [#allocation2], 4
      %s25 = int_to_ptr.vmem [resolvable:$true] %s24
      %30 = dma.hbm_to_vmem [thread:$0]  %s3, 8192, %s25, [#allocation3], 256, 256, 16
    $region17: #{fully_connected_forecaster.1} parent=1 // pred_fallthru
      _
    // Predicated region
    $region18: #{fully_connected_forecaster.1} parent=1 // pred_check
      _
    $region19: #{fully_connected_forecaster.1} parent=1 // pred_check_branch
      %32 = sbr.rel (0) target = $region21
    $region20: #{fully_connected_forecaster.1} parent=1 // pred_region
      _
    $region21: #{fully_connected_forecaster.1} parent=1 // pred_fallthru
      _
    // Predicated region
    $region22: #{fully_connected_forecaster.1} parent=1 // pred_check
      _
    $region23: #{fully_connected_forecaster.1} parent=1 // pred_check_branch
      %34 = sbr.rel (0) target = $region25
    $region24: #{fully_connected_forecaster.1} parent=1 // pred_region
      _
    $region25: #{fully_connected_forecaster.1} parent=1 // pred_fallthru
      _
    // Predicated region
    $region26: #{fully_connected_forecaster.1} parent=1 // pred_check
      _
    $region27: #{fully_connected_forecaster.1} parent=1 // pred_check_branch
      %36 = sbr.rel (0) target = $region29
    $region28: #{fully_connected_forecaster.1} parent=1 // pred_region
      _
    $region29: #{fully_connected_forecaster.1} parent=1 // pred_fallthru
      _
    // Predicated region
    $region30: #{fully_connected_forecaster.1} parent=1 // pred_check
      _
    $region31: #{fully_connected_forecaster.1} parent=1 // pred_check_branch
      %38 = sbr.rel (0) target = $region33
    $region32: #{fully_connected_forecaster.1} parent=1 // pred_region
      %39 = dma.done [#allocation3], 8192
    $region33: #{fully_connected_forecaster.1} parent=1 // pred_fallthru
      _
    %v40 = vld [vmem:[%s0] sm:$0x1]
    %v41 = vld [vmem:[%s1] sm:$0xff]
    %v42 = vld [vmem:[%s1 + $0x8] sm:$0xff]
    %v43 = vld [vmem:[%s1 + $0x10] sm:$0xff]
    %v44 = vld [vmem:[%s1 + $0x18] sm:$0xff]
    %v45 = vld [vmem:[%s1 + $0x20] sm:$0xff]
    %v46 = vld [vmem:[%s1 + $0x28] sm:$0xff]
    %v47 = vld [vmem:[%s1 + $0x30] sm:$0xff]
    %v48 = vld [vmem:[%s1 + $0x38] sm:$0xff]
    %v49 = vld [vmem:[%s1 + $0x40] sm:$0xff]
    %v50 = vld [vmem:[%s1 + $0x48] sm:$0xff]
    %v51 = vld [vmem:[%s1 + $0x50] sm:$0xff]
    %v52 = vld [vmem:[%s1 + $0x58] sm:$0xff]
    %v53 = vld [vmem:[%s1 + $0x60] sm:$0xff]
    %v54 = vld [vmem:[%s1 + $0x68] sm:$0xff]
    %v55 = vld [vmem:[%s1 + $0x70] sm:$0xff]
    %v56 = vld [vmem:[%s1 + $0x78] sm:$0xff]
    %v57 = vld [vmem:[%s1 + $0x80] sm:$0xff]
    %v58 = vld [vmem:[%s1 + $0x88] sm:$0xff]
    %v59 = vld [vmem:[%s1 + $0x90] sm:$0xff]
    %v60 = vld [vmem:[%s1 + $0x98] sm:$0xff]
    %v61 = vld [vmem:[%s1 + $0xa0] sm:$0xff]
    %v62 = vld [vmem:[%s1 + $0xa8] sm:$0xff]
    %v63 = vld [vmem:[%s1 + $0xb0] sm:$0xff]
    %v64 = vld [vmem:[%s1 + $0xb8] sm:$0xff]
    %v65 = vld [vmem:[%s1 + $0xc0] sm:$0xff]
    %v66 = vld [vmem:[%s1 + $0xc8] sm:$0xff]
    %v67 = vld [vmem:[%s1 + $0xd0] sm:$0xff]
    %v68 = vld [vmem:[%s1 + $0xd8] sm:$0xff]
    %v69 = vld [vmem:[%s1 + $0xe0] sm:$0xff]
    %v70 = vld [vmem:[%s1 + $0xe8] sm:$0xff]
    %v71 = vld [vmem:[%s1 + $0xf0] sm:$0xff]
    %v72 = vld [vmem:[%s1 + $0xf8] sm:$0xff]
    %v73 = vld [vmem:[%s2] sm:$0x3]
    %v75 = vlaneseq
    %v76 = vshrl.u32 %v75, 7
    %v77 = vsub.s32 0, %v76
    %v78 = vrot.slane %v73, %v77
    %v79 = vlaneseq
    %v80 = vshrl.u32 %v79, 7
    %v81 = vsub.s32 1, %v80
    %v82 = vrot.slane %v73, %v81
    %85 = vmatprep.subr.mxu0 %v72
    %86 = vmatpush1.msra.mxu0 %v71
    %87 = vmatprep.subr.mxu0 %v70
    %88 = vmatpush1.msra.mxu0 %v69
    %89 = vmatprep.subr.mxu0 %v68
    %90 = vmatpush1.msra.mxu0 %v67
    %91 = vmatprep.subr.mxu0 %v66
    %92 = vmatpush1.msra.mxu0 %v65
    %93 = vmatprep.subr.mxu0 %v64
    %94 = vmatpush1.msra.mxu0 %v63
    %95 = vmatprep.subr.mxu0 %v62
    %96 = vmatpush1.msra.mxu0 %v61
    %97 = vmatprep.subr.mxu0 %v60
    %98 = vmatpush1.msra.mxu0 %v59
    %99 = vmatprep.subr.mxu0 %v58
    %100 = vmatpush1.msra.mxu0 %v57
    %101 = vmatprep.subr.mxu0 %v56
    %102 = vmatpush1.msra.mxu0 %v55
    %103 = vmatprep.subr.mxu0 %v54
    %104 = vmatpush1.msra.mxu0 %v53
    %105 = vmatprep.subr.mxu0 %v52
    %106 = vmatpush1.msra.mxu0 %v51
    %107 = vmatprep.subr.mxu0 %v50
    %108 = vmatpush1.msra.mxu0 %v49
    %109 = vmatprep.subr.mxu0 %v48
    %110 = vmatpush1.msra.mxu0 %v47
    %111 = vmatprep.subr.mxu0 %v46
    %112 = vmatpush1.msra.mxu0 %v45
    %113 = vmatprep.subr.mxu0 %v44
    %114 = vmatpush1.msra.mxu0 %v43
    %115 = vmatprep.subr.mxu0 %v42
    %116 = vmatpush1.msra.mxu0 %v41
    %117 = vmatprep.subr.mxu0 0.0
    %118 = vmatpush2.msra.mxu0 0.0
    %119 = vmatprep.subr.mxu0 0.0
    %120 = vmatpush2.msra.mxu0 0.0
    %121 = vmatprep.subr.mxu0 0.0
    %122 = vmatpush2.msra.mxu0 0.0
    %123 = vmatprep.subr.mxu0 0.0
    %124 = vmatpush2.msra.mxu0 0.0
    %125 = vmatprep.subr.mxu0 0.0
    %126 = vmatpush2.msra.mxu0 0.0
    %127 = vmatprep.subr.mxu0 0.0
    %128 = vmatpush2.msra.mxu0 0.0
    %129 = vmatprep.subr.mxu0 0.0
    %130 = vmatpush2.msra.mxu0 0.0
    %131 = vmatprep.subr.mxu0 0.0
    %132 = vmatpush2.msra.mxu0 0.0
    %133 = vmatprep.subr.mxu0 0.0
    %134 = vmatpush2.msra.mxu0 0.0
    %135 = vmatprep.subr.mxu0 0.0
    %136 = vmatpush2.msra.mxu0 0.0
    %137 = vmatprep.subr.mxu0 0.0
    %138 = vmatpush2.msra.mxu0 0.0
    %139 = vmatprep.subr.mxu0 0.0
    %140 = vmatpush2.msra.mxu0 0.0
    %141 = vmatprep.subr.mxu0 0.0
    %142 = vmatpush2.msra.mxu0 0.0
    %143 = vmatprep.subr.mxu0 0.0
    %144 = vmatpush2.msra.mxu0 0.0
    %145 = vmatprep.subr.mxu0 0.0
    %146 = vmatpush2.msra.mxu0 0.0
    %147 = vmatprep.subr.mxu0 0.0
    %148 = vmatpush2.msra.mxu0 0.0
    %149 = vmatprep.mubr.f32.mxu0 0.0
    %150 = vmatmul.mubr.f32.gmra.mxu0 %v40
    %v151 = vpop.f32.mrf.mxu0
    %v152 = vadd.f32 %v78, %v151
    %v153 = vpop.f32.mrf.mxu0
    %v154 = vadd.f32 %v82, %v153
    %155 = vdwg.mxu0
    %v156 = vmax.f32 %v152, 0.0
    %v157 = vmax.f32 %v154, 0.0
    %v158 = vld [vmem:[#allocation2] sm:$0xff]
    %v159 = vld [vmem:[#allocation2 + $0x8] sm:$0xff]
    %v160 = vld [vmem:[#allocation2 + $0x10] sm:$0xff]
    %v161 = vld [vmem:[#allocation2 + $0x18] sm:$0xff]
    %v162 = vld [vmem:[#allocation2 + $0x20] sm:$0xff]
    %v163 = vld [vmem:[#allocation2 + $0x28] sm:$0xff]
    %v164 = vld [vmem:[#allocation2 + $0x30] sm:$0xff]
    %v165 = vld [vmem:[#allocation2 + $0x38] sm:$0xff]
    %v166 = vld [vmem:[#allocation2 + $0x40] sm:$0xff]
    %v167 = vld [vmem:[#allocation2 + $0x48] sm:$0xff]
    %v168 = vld [vmem:[#allocation2 + $0x50] sm:$0xff]
    %v169 = vld [vmem:[#allocation2 + $0x58] sm:$0xff]
    %v170 = vld [vmem:[#allocation2 + $0x60] sm:$0xff]
    %v171 = vld [vmem:[#allocation2 + $0x68] sm:$0xff]
    %v172 = vld [vmem:[#allocation2 + $0x70] sm:$0xff]
    %v173 = vld [vmem:[#allocation2 + $0x78] sm:$0xff]
    %v174 = vld [vmem:[#allocation2 + $0x80] sm:$0xff]
    %v175 = vld [vmem:[#allocation2 + $0x88] sm:$0xff]
    %v176 = vld [vmem:[#allocation2 + $0x90] sm:$0xff]
    %v177 = vld [vmem:[#allocation2 + $0x98] sm:$0xff]
    %v178 = vld [vmem:[#allocation2 + $0xa0] sm:$0xff]
    %v179 = vld [vmem:[#allocation2 + $0xa8] sm:$0xff]
    %v180 = vld [vmem:[#allocation2 + $0xb0] sm:$0xff]
    %v181 = vld [vmem:[#allocation2 + $0xb8] sm:$0xff]
    %v182 = vld [vmem:[#allocation2 + $0xc0] sm:$0xff]
    %v183 = vld [vmem:[#allocation2 + $0xc8] sm:$0xff]
    %v184 = vld [vmem:[#allocation2 + $0xd0] sm:$0xff]
    %v185 = vld [vmem:[#allocation2 + $0xd8] sm:$0xff]
    %v186 = vld [vmem:[#allocation2 + $0xe0] sm:$0xff]
    %v187 = vld [vmem:[#allocation2 + $0xe8] sm:$0xff]
    %v188 = vld [vmem:[#allocation2 + $0xf0] sm:$0xff]
    %v189 = vld [vmem:[#allocation2 + $0xf8] sm:$0xff]
    %v190 = vld [vmem:[#allocation2 + $0x100] sm:$0xff]
    %v191 = vld [vmem:[#allocation2 + $0x108] sm:$0xff]
    %v192 = vld [vmem:[#allocation2 + $0x110] sm:$0xff]
    %v193 = vld [vmem:[#allocation2 + $0x118] sm:$0xff]
    %v194 = vld [vmem:[#allocation2 + $0x120] sm:$0xff]
    %v195 = vld [vmem:[#allocation2 + $0x128] sm:$0xff]
    %v196 = vld [vmem:[#allocation2 + $0x130] sm:$0xff]
    %v197 = vld [vmem:[#allocation2 + $0x138] sm:$0xff]
    %v198 = vld [vmem:[#allocation2 + $0x140] sm:$0xff]
    %v199 = vld [vmem:[#allocation2 + $0x148] sm:$0xff]
    %v200 = vld [vmem:[#allocation2 + $0x150] sm:$0xff]
    %v201 = vld [vmem:[#allocation2 + $0x158] sm:$0xff]
    %v202 = vld [vmem:[#allocation2 + $0x160] sm:$0xff]
    %v203 = vld [vmem:[#allocation2 + $0x168] sm:$0xff]
    %v204 = vld [vmem:[#allocation2 + $0x170] sm:$0xff]
    %v205 = vld [vmem:[#allocation2 + $0x178] sm:$0xff]
    %v206 = vld [vmem:[#allocation2 + $0x180] sm:$0xff]
    %v207 = vld [vmem:[#allocation2 + $0x188] sm:$0xff]
    %v208 = vld [vmem:[#allocation2 + $0x190] sm:$0xff]
    %v209 = vld [vmem:[#allocation2 + $0x198] sm:$0xff]
    %v210 = vld [vmem:[#allocation2 + $0x1a0] sm:$0xff]
    %v211 = vld [vmem:[#allocation2 + $0x1a8] sm:$0xff]
    %v212 = vld [vmem:[#allocation2 + $0x1b0] sm:$0xff]
    %v213 = vld [vmem:[#allocation2 + $0x1b8] sm:$0xff]
    %v214 = vld [vmem:[#allocation2 + $0x1c0] sm:$0xff]
    %v215 = vld [vmem:[#allocation2 + $0x1c8] sm:$0xff]
    %v216 = vld [vmem:[#allocation2 + $0x1d0] sm:$0xff]
    %v217 = vld [vmem:[#allocation2 + $0x1d8] sm:$0xff]
    %v218 = vld [vmem:[#allocation2 + $0x1e0] sm:$0xff]
    %v219 = vld [vmem:[#allocation2 + $0x1e8] sm:$0xff]
    %v220 = vld [vmem:[#allocation2 + $0x1f0] sm:$0xff]
    %v221 = vld [vmem:[#allocation2 + $0x1f8] sm:$0xff]
    %v222 = vld [vmem:[%s4] sm:$0x3]
    %v224 = vlaneseq
    %v225 = vshrl.u32 %v224, 7
    %v226 = vsub.s32 0, %v225
    %v227 = vrot.slane %v222, %v226
    %v228 = vlaneseq
    %v229 = vshrl.u32 %v228, 7
    %v230 = vsub.s32 1, %v229
    %v231 = vrot.slane %v222, %v230
    %234 = vmatprep.subr.mxu0 %v189
    %235 = vmatpush1.msra.mxu0 %v188
    %236 = vmatprep.subr.mxu0 %v187
    %237 = vmatpush1.msra.mxu0 %v186
    %238 = vmatprep.subr.mxu0 %v185
    %239 = vmatpush1.msra.mxu0 %v184
    %240 = vmatprep.subr.mxu0 %v183
    %241 = vmatpush1.msra.mxu0 %v182
    %242 = vmatprep.subr.mxu0 %v181
    %243 = vmatpush1.msra.mxu0 %v180
    %244 = vmatprep.subr.mxu0 %v179
    %245 = vmatpush1.msra.mxu0 %v178
    %246 = vmatprep.subr.mxu0 %v177
    %247 = vmatpush1.msra.mxu0 %v176
    %248 = vmatprep.subr.mxu0 %v175
    %249 = vmatpush1.msra.mxu0 %v174
    %250 = vmatprep.subr.mxu0 %v173
    %251 = vmatpush1.msra.mxu0 %v172
    %252 = vmatprep.subr.mxu0 %v171
    %253 = vmatpush1.msra.mxu0 %v170
    %254 = vmatprep.subr.mxu0 %v169
    %255 = vmatpush1.msra.mxu0 %v168
    %256 = vmatprep.subr.mxu0 %v167
    %257 = vmatpush1.msra.mxu0 %v166
    %258 = vmatprep.subr.mxu0 %v165
    %259 = vmatpush1.msra.mxu0 %v164
    %260 = vmatprep.subr.mxu0 %v163
    %261 = vmatpush1.msra.mxu0 %v162
    %262 = vmatprep.subr.mxu0 %v161
    %263 = vmatpush1.msra.mxu0 %v160
    %264 = vmatprep.subr.mxu0 %v159
    %265 = vmatpush1.msra.mxu0 %v158
    %266 = vmatprep.subr.mxu0 %v221
    %267 = vmatpush2.msra.mxu0 %v220
    %268 = vmatprep.subr.mxu0 %v219
    %269 = vmatpush2.msra.mxu0 %v218
    %270 = vmatprep.subr.mxu0 %v217
    %271 = vmatpush2.msra.mxu0 %v216
    %272 = vmatprep.subr.mxu0 %v215
    %273 = vmatpush2.msra.mxu0 %v214
    %274 = vmatprep.subr.mxu0 %v213
    %275 = vmatpush2.msra.mxu0 %v212
    %276 = vmatprep.subr.mxu0 %v211
    %277 = vmatpush2.msra.mxu0 %v210
    %278 = vmatprep.subr.mxu0 %v209
    %279 = vmatpush2.msra.mxu0 %v208
    %280 = vmatprep.subr.mxu0 %v207
    %281 = vmatpush2.msra.mxu0 %v206
    %282 = vmatprep.subr.mxu0 %v205
    %283 = vmatpush2.msra.mxu0 %v204
    %284 = vmatprep.subr.mxu0 %v203
    %285 = vmatpush2.msra.mxu0 %v202
    %286 = vmatprep.subr.mxu0 %v201
    %287 = vmatpush2.msra.mxu0 %v200
    %288 = vmatprep.subr.mxu0 %v199
    %289 = vmatpush2.msra.mxu0 %v198
    %290 = vmatprep.subr.mxu0 %v197
    %291 = vmatpush2.msra.mxu0 %v196
    %292 = vmatprep.subr.mxu0 %v195
    %293 = vmatpush2.msra.mxu0 %v194
    %294 = vmatprep.subr.mxu0 %v193
    %295 = vmatpush2.msra.mxu0 %v192
    %296 = vmatprep.subr.mxu0 %v191
    %297 = vmatpush2.msra.mxu0 %v190
    %298 = vmatprep.mubr.f32.mxu0 %v157
    %299 = vmatmul.mubr.f32.gmra.mxu0 %v156
    %v300 = vpop.f32.mrf.mxu0
    %v301 = vadd.f32 %v227, %v300
    %v302 = vpop.f32.mrf.mxu0
    %v303 = vadd.f32 %v231, %v302
    %304 = vdwg.mxu0
    %v305 = vmax.f32 %v301, 0.0
    %v306 = vmax.f32 %v303, 0.0
    %v307 = vld [vmem:[%s5] sm:$0xff]
    %v308 = vld [vmem:[%s5 + $0x8] sm:$0xff]
    %v309 = vld [vmem:[%s5 + $0x10] sm:$0xff]
    %v310 = vld [vmem:[%s5 + $0x18] sm:$0xff]
    %v311 = vld [vmem:[%s5 + $0x20] sm:$0xff]
    %v312 = vld [vmem:[%s5 + $0x28] sm:$0xff]
    %v313 = vld [vmem:[%s5 + $0x30] sm:$0xff]
    %v314 = vld [vmem:[%s5 + $0x38] sm:$0xff]
    %v315 = vld [vmem:[%s5 + $0x40] sm:$0xff]
    %v316 = vld [vmem:[%s5 + $0x48] sm:$0xff]
    %v317 = vld [vmem:[%s5 + $0x50] sm:$0xff]
    %v318 = vld [vmem:[%s5 + $0x58] sm:$0xff]
    %v319 = vld [vmem:[%s5 + $0x60] sm:$0xff]
    %v320 = vld [vmem:[%s5 + $0x68] sm:$0xff]
    %v321 = vld [vmem:[%s5 + $0x70] sm:$0xff]
    %v322 = vld [vmem:[%s5 + $0x78] sm:$0xff]
    %v323 = vld [vmem:[%s5 + $0x80] sm:$0xff]
    %v324 = vld [vmem:[%s5 + $0x88] sm:$0xff]
    %v325 = vld [vmem:[%s5 + $0x90] sm:$0xff]
    %v326 = vld [vmem:[%s5 + $0x98] sm:$0xff]
    %v327 = vld [vmem:[%s5 + $0xa0] sm:$0xff]
    %v328 = vld [vmem:[%s5 + $0xa8] sm:$0xff]
    %v329 = vld [vmem:[%s5 + $0xb0] sm:$0xff]
    %v330 = vld [vmem:[%s5 + $0xb8] sm:$0xff]
    %v331 = vld [vmem:[%s5 + $0xc0] sm:$0xff]
    %v332 = vld [vmem:[%s5 + $0xc8] sm:$0xff]
    %v333 = vld [vmem:[%s5 + $0xd0] sm:$0xff]
    %v334 = vld [vmem:[%s5 + $0xd8] sm:$0xff]
    %v335 = vld [vmem:[%s5 + $0xe0] sm:$0xff]
    %v336 = vld [vmem:[%s5 + $0xe8] sm:$0xff]
    %v337 = vld [vmem:[%s5 + $0xf0] sm:$0xff]
    %v338 = vld [vmem:[%s5 + $0xf8] sm:$0xff]
    %v339 = vld [vmem:[%s6] sm:$0x1]
    %340 = vmatprep.subr.mxu0 0.0
    %341 = vmatpush1.msra.mxu0 %v322
    %342 = vmatprep.subr.mxu0 0.0
    %343 = vmatpush1.msra.mxu0 %v321
    %344 = vmatprep.subr.mxu0 0.0
    %345 = vmatpush1.msra.mxu0 %v320
    %346 = vmatprep.subr.mxu0 0.0
    %347 = vmatpush1.msra.mxu0 %v319
    %348 = vmatprep.subr.mxu0 0.0
    %349 = vmatpush1.msra.mxu0 %v318
    %350 = vmatprep.subr.mxu0 0.0
    %351 = vmatpush1.msra.mxu0 %v317
    %352 = vmatprep.subr.mxu0 0.0
    %353 = vmatpush1.msra.mxu0 %v316
    %354 = vmatprep.subr.mxu0 0.0
    %355 = vmatpush1.msra.mxu0 %v315
    %356 = vmatprep.subr.mxu0 0.0
    %357 = vmatpush1.msra.mxu0 %v314
    %358 = vmatprep.subr.mxu0 0.0
    %359 = vmatpush1.msra.mxu0 %v313
    %360 = vmatprep.subr.mxu0 0.0
    %361 = vmatpush1.msra.mxu0 %v312
    %362 = vmatprep.subr.mxu0 0.0
    %363 = vmatpush1.msra.mxu0 %v311
    %364 = vmatprep.subr.mxu0 0.0
    %365 = vmatpush1.msra.mxu0 %v310
    %366 = vmatprep.subr.mxu0 0.0
    %367 = vmatpush1.msra.mxu0 %v309
    %368 = vmatprep.subr.mxu0 0.0
    %369 = vmatpush1.msra.mxu0 %v308
    %370 = vmatprep.subr.mxu0 0.0
    %371 = vmatpush1.msra.mxu0 %v307
    %372 = vmatprep.subr.mxu0 0.0
    %373 = vmatpush2.msra.mxu0 %v338
    %374 = vmatprep.subr.mxu0 0.0
    %375 = vmatpush2.msra.mxu0 %v337
    %376 = vmatprep.subr.mxu0 0.0
    %377 = vmatpush2.msra.mxu0 %v336
    %378 = vmatprep.subr.mxu0 0.0
    %379 = vmatpush2.msra.mxu0 %v335
    %380 = vmatprep.subr.mxu0 0.0
    %381 = vmatpush2.msra.mxu0 %v334
    %382 = vmatprep.subr.mxu0 0.0
    %383 = vmatpush2.msra.mxu0 %v333
    %384 = vmatprep.subr.mxu0 0.0
    %385 = vmatpush2.msra.mxu0 %v332
    %386 = vmatprep.subr.mxu0 0.0
    %387 = vmatpush2.msra.mxu0 %v331
    %388 = vmatprep.subr.mxu0 0.0
    %389 = vmatpush2.msra.mxu0 %v330
    %390 = vmatprep.subr.mxu0 0.0
    %391 = vmatpush2.msra.mxu0 %v329
    %392 = vmatprep.subr.mxu0 0.0
    %393 = vmatpush2.msra.mxu0 %v328
    %394 = vmatprep.subr.mxu0 0.0
    %395 = vmatpush2.msra.mxu0 %v327
    %396 = vmatprep.subr.mxu0 0.0
    %397 = vmatpush2.msra.mxu0 %v326
    %398 = vmatprep.subr.mxu0 0.0
    %399 = vmatpush2.msra.mxu0 %v325
    %400 = vmatprep.subr.mxu0 0.0
    %401 = vmatpush2.msra.mxu0 %v324
    %402 = vmatprep.subr.mxu0 0.0
    %403 = vmatpush2.msra.mxu0 %v323
    %404 = vmatprep.mubr.f32.mxu0 %v306
    %405 = vmatmul.mubr.f32.gmra.mxu0 %v305
    %v406 = vpop.f32.mrf.mxu0
    %v407 = vadd.f32 %v339, %v406
    %v408 = vpop.f32.mrf.mxu0
    %409 = vdwg.mxu0
    %vm410 = vcmask 516096
    %411 = vst.msk [vmem:[%s7] sm:$0x1] %vm410, %v407
    // Predicated region
    $region34: #{fully_connected_forecaster.1} parent=1 // pred_check
      _
    $region35: #{fully_connected_forecaster.1} parent=1 // pred_check_branch
      %413 = sbr.rel (0) target = $region37
    $region36: #{fully_connected_forecaster.1} parent=1 // pred_region
      _
    $region37: #{fully_connected_forecaster.1} parent=1 // pred_fallthru
      _
    // Predicated region
    $region38: #{fully_connected_forecaster.1} parent=1 // pred_check
      _
    $region39: #{fully_connected_forecaster.1} parent=1 // pred_check_branch
      %415 = sbr.rel (0) target = $region41
    $region40: #{fully_connected_forecaster.1} parent=1 // pred_region
      _
    $region41: #{fully_connected_forecaster.1} parent=1 // pred_fallthru
      _
    %416 = vsyncpa [#allocation3], 1

</llo_original>
